<compile_context>
chip_gen: v7x
topology: tpu7x:2x2x1
jax: 0.10.0
libtpu: 0.0.40
codegen_flags: <defaults>
</compile_context>

<pallas_src>
import jax
import jax.numpy as jnp
from jax.experimental import pallas as pl
from jax.experimental.pallas import tpu as pltpu

HIDDEN_DIM = 16
N = 2 * HIDDEN_DIM          # config.hidden_dim * 2
IS_COVERAGE = True

# Stay inside the default scoped-VMEM limit so no compiler override is needed.
_VMEM_BUDGET_BYTES = 24 * 1024 * 1024


def attention_kernel(s_ref, enc_out_ref, enc_feat_ref, mask_ref, cov_ref,
                     wdp_t_ref, bdp_ref, vw_ref, wc_ref,
                     ct_ref, attn_ref, cov_out_ref):
    # Per-step blocks:
    #   s_ref        (B, n)       enc_out_ref (B, t_k, n)  enc_feat_ref (B, t_k, n)
    #   mask_ref     (B, t_k)     cov_ref     (B, t_k)
    #   wdp_t_ref    (n, n)       bdp_ref     (1, n)
    #   vw_ref       (1, n)       wc_ref      (1, n)
    f32 = jnp.float32

    s = s_ref[...].astype(f32)                                         # (B, n)
    # decode_proj(s_t_hat): whole-block (B, n) @ (n, n) on the MXU.
    dec_fea = jnp.dot(s, wdp_t_ref[...].astype(f32),
                      preferred_element_type=f32) + bdp_ref[...].astype(f32)

    cov = cov_ref[...].astype(f32)                                     # (B, t_k)
    # coverage_feature: broadcast multiply on the VPU (not a K=1 MXU matmul).
    cov_feat = cov[..., None] * wc_ref[...].astype(f32)                # (B, t_k, n)

    att = enc_feat_ref[...].astype(f32) + dec_fea[:, None, :] + cov_feat
    e = jnp.tanh(att)                                                  # (B, t_k, n)

    # scores = v(e): VPU multiply + lane reduction (not an N=1 matmul).
    scores = jnp.sum(e * vw_ref[...].astype(f32), axis=-1)             # (B, t_k)

    # Fused masked softmax + renormalization: softmax(scores)*mask / sum(...)
    # == exp(scores - m)*mask / sum(exp(scores - m)*mask)  (Z cancels).
    m = jnp.max(scores, axis=-1, keepdims=True)
    masked_ex = jnp.exp(scores - m) * mask_ref[...].astype(f32)        # (B, t_k)
    denom = jnp.sum(masked_ex, axis=-1, keepdims=True)
    # NOTE: if a mask row is all zeros this divides by zero, matching the
    # PyTorch reference behavior.  Exact divide (no approx reciprocal).
    attn = masked_ex / denom                                           # (B, t_k)

    # context vector c_t = sum_k attn[b,k] * enc_out[b,k,:]
    c_t = jnp.sum(attn[..., None] * enc_out_ref[...].astype(f32), axis=1)  # (B, n)

    ct_ref[...] = c_t.astype(ct_ref.dtype)
    attn_ref[...] = attn.astype(attn_ref.dtype)
    cov_out_ref[...] = (cov + attn).astype(cov_out_ref.dtype)


def _pick_b_tile(b, t_k, n, elem_bytes=4, vmem_budget=_VMEM_BUDGET_BYTES):
    """Pick a batch tile that (a) fits a conservative double-buffered VMEM
    budget and (b) keeps every block (8,128)-legal: either the full batch
    (block == full array dim) or a multiple of 8 that divides b."""
    per_elem = (
        2 * 2 * t_k * n * elem_bytes          # enc_out + enc_feat, double-buffered
        + 2 * 6 * t_k * 4                     # mask/cov in + attn/cov out, buffered
        + 2 * 2 * n * 4                       # s_t_hat in + c_t out, buffered
    )
    cap = max(1, vmem_budget // max(per_elem, 1))
    if cap >= b:
        return b                               # whole batch in one block
    for d in range(min(cap, b), 7, -1):
        if d % 8 == 0 and b % d == 0:
            return d
    return b                                   # fallback: full batch (always legal)


def attention_forward(s_t_hat, encoder_outputs, encoder_feature,
                      enc_padding_mask, coverage, params, *, b_tile=None):
    b, t_k, n = encoder_outputs.shape
    enc_feat = encoder_feature.reshape(b, t_k, n)

    wdp_t = jnp.asarray(params["W_dp"]).T            # (n, n)  decode_proj weight^T
    bdp = jnp.asarray(params["b_dp"]).reshape(1, n)  # (1, n)  decode_proj bias
    vw = jnp.asarray(params["v_w"]).reshape(1, n)    # (1, n)  v weight (Linear(n,1))
    wc = jnp.asarray(params["W_c"]).reshape(1, n)    # (1, n)  W_c weight (Linear(1,n))

    if b_tile is None:
        b_tile = _pick_b_tile(b, t_k, n,
                              elem_bytes=jnp.dtype(encoder_outputs.dtype).itemsize)
    assert b % b_tile == 0, (b, b_tile)
    grid = (b // b_tile,)

    grid_spec = pltpu.PrefetchScalarGridSpec(
        num_scalar_prefetch=0,
        grid=grid,
        in_specs=[
            pl.BlockSpec((b_tile, n), lambda i: (i, 0)),          # s_t_hat
            pl.BlockSpec((b_tile, t_k, n), lambda i: (i, 0, 0)),  # encoder_outputs
            pl.BlockSpec((b_tile, t_k, n), lambda i: (i, 0, 0)),  # encoder_feature
            pl.BlockSpec((b_tile, t_k), lambda i: (i, 0)),        # enc_padding_mask
            pl.BlockSpec((b_tile, t_k), lambda i: (i, 0)),        # coverage
            pl.BlockSpec((n, n), lambda i: (0, 0)),               # W_dp.T
            pl.BlockSpec((1, n), lambda i: (0, 0)),               # b_dp
            pl.BlockSpec((1, n), lambda i: (0, 0)),               # v weight
            pl.BlockSpec((1, n), lambda i: (0, 0)),               # W_c weight
        ],
        out_specs=[
            pl.BlockSpec((b_tile, n), lambda i: (i, 0)),          # c_t
            pl.BlockSpec((b_tile, t_k), lambda i: (i, 0)),        # attn_dist
            pl.BlockSpec((b_tile, t_k), lambda i: (i, 0)),        # coverage out
        ],
    )

    out_shapes = (
        jax.ShapeDtypeStruct((b, n), jnp.float32),
        jax.ShapeDtypeStruct((b, t_k), jnp.float32),
        jax.ShapeDtypeStruct((b, t_k), jnp.float32),
    )

    c_t, attn_dist, cov_out = pl.pallas_call(
        attention_kernel,
        out_shape=out_shapes,
        grid_spec=grid_spec,
        compiler_params=pltpu.CompilerParams(
            dimension_semantics=("parallel",)),
    )(s_t_hat, encoder_outputs, enc_feat, enc_padding_mask, coverage,
      wdp_t, bdp, vw, wc)
    return c_t, attn_dist, cov_out


def attention_reference(s_t_hat, encoder_outputs, encoder_feature,
                        enc_padding_mask, coverage, params):
    """Pure-JAX mirror of the PyTorch forward (f32-accurate oracle)."""
    b, t_k, n = encoder_outputs.shape
    dec_fea = jnp.dot(s_t_hat, params["W_dp"].T,
                      precision=jax.lax.Precision.HIGHEST) + params["b_dp"]
    dec_exp = jnp.broadcast_to(dec_fea[:, None, :], (b, t_k, n)).reshape(-1, n)
    att = encoder_feature + dec_exp
    cov_feat = coverage.reshape(-1, 1) * params["W_c"].reshape(1, n)   # (b*t_k, n)
    att = att + cov_feat
    e = jnp.tanh(att)
    scores = jnp.sum(e * params["v_w"].reshape(1, n), axis=-1).reshape(b, t_k)
    attn_ = jax.nn.softmax(scores, axis=1) * enc_padding_mask
    norm = attn_.sum(1, keepdims=True)
    attn = attn_ / norm
    c_t = jnp.sum(attn[..., None] * encoder_outputs, axis=1)
    cov_out = coverage + attn
    return c_t, attn, cov_out


if __name__ == "__main__":
    b, t_k, n = 8, 16, N
    key = jax.random.PRNGKey(0)
    ks = jax.random.split(key, 8)

    # Deterministic synthetic parameters (shapes from the PyTorch __init__).
    params = {
        "W_dp": jax.random.normal(ks[0], (n, n), jnp.float32) * 0.1,  # decode_proj weight
        "b_dp": jax.random.normal(ks[1], (n,), jnp.float32) * 0.1,    # decode_proj bias
        "v_w": jax.random.normal(ks[2], (1, n), jnp.float32) * 0.1,   # v weight (no bias)
        "W_c": jax.random.normal(ks[3], (n, 1), jnp.float32) * 0.1,   # W_c weight (no bias)
    }

    s_t_hat = jax.random.normal(ks[4], (b, n), jnp.float32)
    encoder_outputs = jax.random.normal(ks[5], (b, t_k, n), jnp.float32)
    encoder_feature = jax.random.normal(ks[6], (b * t_k, n), jnp.float32)
    coverage = jax.random.uniform(ks[7], (b, t_k), jnp.float32)
    lengths = jnp.array([16, 16, 12, 16, 10, 16, 14, 7], dtype=jnp.int32)
    enc_padding_mask = (jnp.arange(t_k)[None, :] < lengths[:, None]).astype(jnp.float32)

    c_t, attn_dist, cov_out = attention_forward(
        s_t_hat, encoder_outputs, encoder_feature, enc_padding_mask,
        coverage, params)
    jax.block_until_ready((c_t, attn_dist, cov_out))

    c_t_ref, attn_ref, cov_ref = attention_reference(
        s_t_hat, encoder_outputs, encoder_feature, enc_padding_mask,
        coverage, params)

    # Tolerance covers the MXU f32 matmul path (multi-pass bf16) vs. the
    # HIGHEST-precision oracle; expected error is O(1e-4) or below.
    assert jnp.allclose(c_t, c_t_ref, atol=5e-3, rtol=5e-3), "c_t mismatch"
    assert jnp.allclose(attn_dist, attn_ref, atol=5e-3, rtol=5e-3), "attn mismatch"
    assert jnp.allclose(cov_out, cov_ref, atol=5e-3, rtol=5e-3), "coverage mismatch"

    print("KERNEL_OK")
</pallas_src>

<mosaic_0001>
module attributes {stable_mosaic.version = 11 : i64} {
  func.func @attention_kernel(%arg0: i32, %arg1: memref<8x32xf32, #tpu.memory_space<vmem>>, %arg2: memref<8x16x32xf32, #tpu.memory_space<vmem>>, %arg3: memref<8x16x32xf32, #tpu.memory_space<vmem>>, %arg4: memref<8x16xf32, #tpu.memory_space<vmem>>, %arg5: memref<8x16xf32, #tpu.memory_space<vmem>>, %arg6: memref<32x32xf32, #tpu.memory_space<vmem>>, %arg7: memref<1x32xf32, #tpu.memory_space<vmem>>, %arg8: memref<1x32xf32, #tpu.memory_space<vmem>>, %arg9: memref<1x32xf32, #tpu.memory_space<vmem>>, %arg10: memref<8x32xf32, #tpu.memory_space<vmem>>, %arg11: memref<8x16xf32, #tpu.memory_space<vmem>>, %arg12: memref<8x16xf32, #tpu.memory_space<vmem>>) attributes {dimension_semantics = [#tpu.dimension_semantics<parallel>], iteration_bounds = array<i64: 1>, scalar_prefetch = 0 : i64, scratch_operands = 0 : i64, tpu.core_type = #tpu.core_type<tc>, window_params = [{transform_indices = @transform_0, window_bounds = array<i64: 8, 32>}, {transform_indices = @transform_1, window_bounds = array<i64: 8, 16, 32>}, {transform_indices = @transform_2, window_bounds = array<i64: 8, 16, 32>}, {transform_indices = @transform_3, window_bounds = array<i64: 8, 16>}, {transform_indices = @transform_4, window_bounds = array<i64: 8, 16>}, {pipeline_mode = #tpu.pipeline_mode<synchronous>, transform_indices = @transform_5, window_bounds = array<i64: 32, 32>}, {pipeline_mode = #tpu.pipeline_mode<synchronous>, transform_indices = @transform_6, window_bounds = array<i64: 1, 32>}, {pipeline_mode = #tpu.pipeline_mode<synchronous>, transform_indices = @transform_7, window_bounds = array<i64: 1, 32>}, {pipeline_mode = #tpu.pipeline_mode<synchronous>, transform_indices = @transform_8, window_bounds = array<i64: 1, 32>}, {transform_indices = @transform_9, window_bounds = array<i64: 8, 32>}, {transform_indices = @transform_10, window_bounds = array<i64: 8, 16>}, {transform_indices = @transform_11, window_bounds = array<i64: 8, 16>}]} {
    %c0 = arith.constant 0 : index
    %c0_0 = arith.constant 0 : index
    %0 = vector.load %arg1[%c0, %c0_0] : memref<8x32xf32, #tpu.memory_space<vmem>>, vector<8x32xf32>
    %c0_1 = arith.constant 0 : index
    %c0_2 = arith.constant 0 : index
    %1 = vector.load %arg6[%c0_1, %c0_2] : memref<32x32xf32, #tpu.memory_space<vmem>>, vector<32x32xf32>
    %cst = arith.constant dense<0.000000e+00> : vector<8x32xf32>
    %2 = tpu.matmul %0, %1, %cst {dimension_numbers = #tpu.dot_dimension_numbers<[1], [0], [0], [1], [0, 0, 1, 1], [], []>} : vector<8x32xf32>, vector<32x32xf32>, vector<8x32xf32> -> vector<8x32xf32>
    %c0_3 = arith.constant 0 : index
    %c0_4 = arith.constant 0 : index
    %3 = vector.load %arg7[%c0_3, %c0_4] : memref<1x32xf32, #tpu.memory_space<vmem>>, vector<1x32xf32>
    %4 = vector.broadcast %3 : vector<1x32xf32> to vector<8x32xf32>
    %5 = arith.addf %2, %4 : vector<8x32xf32>
    %c0_5 = arith.constant 0 : index
    %c0_6 = arith.constant 0 : index
    %6 = vector.load %arg5[%c0_5, %c0_6] : memref<8x16xf32, #tpu.memory_space<vmem>>, vector<8x16xf32>
    %7 = vector.shape_cast %6 : vector<8x16xf32> to vector<8x16x1xf32>
    %c0_7 = arith.constant 0 : index
    %c0_8 = arith.constant 0 : index
    %8 = vector.load %arg9[%c0_7, %c0_8] : memref<1x32xf32, #tpu.memory_space<vmem>>, vector<1x32xf32>
    %9 = vector.shape_cast %8 : vector<1x32xf32> to vector<1x1x32xf32>
    %10 = vector.broadcast %7 : vector<8x16x1xf32> to vector<8x16x32xf32>
    %11 = vector.broadcast %9 : vector<1x1x32xf32> to vector<8x16x32xf32>
    %12 = arith.mulf %10, %11 : vector<8x16x32xf32>
    %c0_9 = arith.constant 0 : index
    %c0_10 = arith.constant 0 : index
    %c0_11 = arith.constant 0 : index
    %13 = vector.load %arg3[%c0_9, %c0_10, %c0_11] : memref<8x16x32xf32, #tpu.memory_space<vmem>>, vector<8x16x32xf32>
    %14 = vector.shape_cast %5 : vector<8x32xf32> to vector<8x1x32xf32>
    %15 = vector.broadcast %14 : vector<8x1x32xf32> to vector<8x16x32xf32>
    %16 = arith.addf %13, %15 : vector<8x16x32xf32>
    %17 = arith.addf %16, %12 : vector<8x16x32xf32>
    %18 = math.tanh %17 : vector<8x16x32xf32>
    %c0_12 = arith.constant 0 : index
    %c0_13 = arith.constant 0 : index
    %19 = vector.load %arg8[%c0_12, %c0_13] : memref<1x32xf32, #tpu.memory_space<vmem>>, vector<1x32xf32>
    %20 = vector.shape_cast %19 : vector<1x32xf32> to vector<1x1x32xf32>
    %21 = vector.broadcast %20 : vector<1x1x32xf32> to vector<8x16x32xf32>
    %22 = arith.mulf %18, %21 : vector<8x16x32xf32>
    %cst_14 = arith.constant dense<0.000000e+00> : vector<8x16xf32>
    %23 = vector.multi_reduction <add>, %22, %cst_14 [2] : vector<8x16x32xf32> to vector<8x16xf32>
    %cst_15 = arith.constant dense<0xFF800000> : vector<8xf32>
    %24 = vector.multi_reduction <maximumf>, %23, %cst_15 [1] : vector<8x16xf32> to vector<8xf32>
    %25 = vector.shape_cast %24 : vector<8xf32> to vector<8x1xf32>
    %26 = vector.broadcast %25 : vector<8x1xf32> to vector<8x16xf32>
    %27 = arith.subf %23, %26 : vector<8x16xf32>
    %28 = math.exp %27 : vector<8x16xf32>
    %c0_16 = arith.constant 0 : index
    %c0_17 = arith.constant 0 : index
    %29 = vector.load %arg4[%c0_16, %c0_17] : memref<8x16xf32, #tpu.memory_space<vmem>>, vector<8x16xf32>
    %30 = arith.mulf %28, %29 : vector<8x16xf32>
    %cst_18 = arith.constant dense<0.000000e+00> : vector<8xf32>
    %31 = vector.multi_reduction <add>, %30, %cst_18 [1] : vector<8x16xf32> to vector<8xf32>
    %32 = vector.shape_cast %31 : vector<8xf32> to vector<8x1xf32>
    %33 = vector.broadcast %32 : vector<8x1xf32> to vector<8x16xf32>
    %34 = arith.divf %30, %33 : vector<8x16xf32>
    %35 = vector.shape_cast %34 : vector<8x16xf32> to vector<8x16x1xf32>
    %c0_19 = arith.constant 0 : index
    %c0_20 = arith.constant 0 : index
    %c0_21 = arith.constant 0 : index
    %36 = vector.load %arg2[%c0_19, %c0_20, %c0_21] : memref<8x16x32xf32, #tpu.memory_space<vmem>>, vector<8x16x32xf32>
    %37 = vector.broadcast %35 : vector<8x16x1xf32> to vector<8x16x32xf32>
    %38 = arith.mulf %37, %36 : vector<8x16x32xf32>
    %cst_22 = arith.constant dense<0.000000e+00> : vector<8x32xf32>
    %39 = vector.multi_reduction <add>, %38, %cst_22 [1] : vector<8x16x32xf32> to vector<8x32xf32>
    %c0_23 = arith.constant 0 : index
    %c0_24 = arith.constant 0 : index
    %40 = vector.load %arg10[%c0_23, %c0_24] : memref<8x32xf32, #tpu.memory_space<vmem>>, vector<8x32xf32>
    tpu.vector_store %arg10[%c0_23, %c0_24], %39 {strides = array<i32>} : memref<8x32xf32, #tpu.memory_space<vmem>>, vector<8x32xf32>,
    %c0_25 = arith.constant 0 : index
    %c0_26 = arith.constant 0 : index
    %41 = vector.load %arg11[%c0_25, %c0_26] : memref<8x16xf32, #tpu.memory_space<vmem>>, vector<8x16xf32>
    tpu.vector_store %arg11[%c0_25, %c0_26], %34 {strides = array<i32>} : memref<8x16xf32, #tpu.memory_space<vmem>>, vector<8x16xf32>,
    %42 = arith.addf %6, %34 : vector<8x16xf32>
    %c0_27 = arith.constant 0 : index
    %c0_28 = arith.constant 0 : index
    %43 = vector.load %arg12[%c0_27, %c0_28] : memref<8x16xf32, #tpu.memory_space<vmem>>, vector<8x16xf32>
    tpu.vector_store %arg12[%c0_27, %c0_28], %42 {strides = array<i32>} : memref<8x16xf32, #tpu.memory_space<vmem>>, vector<8x16xf32>,
    return
  }
  func.func @transform_0(%arg0: i32) -> (i32, i32) {
    %c0_i32 = arith.constant 0 : i32
    %c0_i32_0 = arith.constant 0 : i32
    return %arg0, %c0_i32 : i32, i32
  }
  func.func @transform_1(%arg0: i32) -> (i32, i32, i32) {
    %c0_i32 = arith.constant 0 : i32
    %c0_i32_0 = arith.constant 0 : i32
    %c0_i32_1 = arith.constant 0 : i32
    return %arg0, %c0_i32, %c0_i32_0 : i32, i32, i32
  }
  func.func @transform_2(%arg0: i32) -> (i32, i32, i32) {
    %c0_i32 = arith.constant 0 : i32
    %c0_i32_0 = arith.constant 0 : i32
    %c0_i32_1 = arith.constant 0 : i32
    return %arg0, %c0_i32, %c0_i32_0 : i32, i32, i32
  }
  func.func @transform_3(%arg0: i32) -> (i32, i32) {
    %c0_i32 = arith.constant 0 : i32
    %c0_i32_0 = arith.constant 0 : i32
    return %arg0, %c0_i32 : i32, i32
  }
  func.func @transform_4(%arg0: i32) -> (i32, i32) {
    %c0_i32 = arith.constant 0 : i32
    %c0_i32_0 = arith.constant 0 : i32
    return %arg0, %c0_i32 : i32, i32
  }
  func.func @transform_5(%arg0: i32) -> (i32, i32) {
    %c0_i32 = arith.constant 0 : i32
    %c0_i32_0 = arith.constant 0 : i32
    %c0_i32_1 = arith.constant 0 : i32
    return %c0_i32, %c0_i32_0 : i32, i32
  }
  func.func @transform_6(%arg0: i32) -> (i32, i32) {
    %c0_i32 = arith.constant 0 : i32
    %c0_i32_0 = arith.constant 0 : i32
    %c0_i32_1 = arith.constant 0 : i32
    return %c0_i32, %c0_i32_0 : i32, i32
  }
  func.func @transform_7(%arg0: i32) -> (i32, i32) {
    %c0_i32 = arith.constant 0 : i32
    %c0_i32_0 = arith.constant 0 : i32
    %c0_i32_1 = arith.constant 0 : i32
    return %c0_i32, %c0_i32_0 : i32, i32
  }
  func.func @transform_8(%arg0: i32) -> (i32, i32) {
    %c0_i32 = arith.constant 0 : i32
    %c0_i32_0 = arith.constant 0 : i32
    %c0_i32_1 = arith.constant 0 : i32
    return %c0_i32, %c0_i32_0 : i32, i32
  }
  func.func @transform_9(%arg0: i32) -> (i32, i32) {
    %c0_i32 = arith.constant 0 : i32
    %c0_i32_0 = arith.constant 0 : i32
    return %arg0, %c0_i32 : i32, i32
  }
  func.func @transform_10(%arg0: i32) -> (i32, i32) {
    %c0_i32 = arith.constant 0 : i32
    %c0_i32_0 = arith.constant 0 : i32
    return %arg0, %c0_i32 : i32, i32
  }
  func.func @transform_11(%arg0: i32) -> (i32, i32) {
    %c0_i32 = arith.constant 0 : i32
    %c0_i32_0 = arith.constant 0 : i32
    return %arg0, %c0_i32 : i32, i32
  }
}

</mosaic_0001>

<llo_original>
// kernel: tpu_custom_call.1
$region0: #{tpu_custom_call.1}
  #allocation0 [shape = 'u32[]', space=smem, size = 0x4, offset = 0x4, fixed_abs, tag = 'smem constant byte address 0x4 - core index']
  #allocation1 [shape = 'u32[144,128]{1,0:T(1,128)}', space=vmem, size = 0x12000, scoped, tag = 'internal scratch']
  %s0 = inlined_call_operand.hbm [shape: f32[8,32], index: 0, kind: input, shape index: {}]
  %s1 = inlined_call_operand.hbm [shape: f32[8,16,32], index: 1, kind: input, shape index: {}]
  %s2 = inlined_call_operand.hbm [shape: f32[8,16,32], index: 2, kind: input, shape index: {}]
  %s3 = inlined_call_operand.vmem [shape: f32[8,16], index: 3, kind: input, shape index: {}]
  %s4 = inlined_call_operand.hbm [shape: f32[8,16], index: 4, kind: input, shape index: {}]
  %s5 = inlined_call_operand.hbm [shape: f32[32,32], index: 5, kind: input, shape index: {}]
  %s6 = inlined_call_operand.vmem [shape: f32[1,32], index: 6, kind: input, shape index: {}]
  %s7 = inlined_call_operand.vmem [shape: f32[1,32], index: 7, kind: input, shape index: {}]
  %s8 = inlined_call_operand.vmem [shape: f32[1,32], index: 8, kind: input, shape index: {}]
  %s9 = inlined_call_operand.hbm [shape: f32[8,32], index: 9, kind: output, shape index: {0}]
  %s10 = inlined_call_operand.hbm [shape: f32[8,16], index: 10, kind: output, shape index: {1}]
  %s11 = inlined_call_operand.hbm [shape: f32[8,16], index: 11, kind: output, shape index: {2}]
  %12 = xla_tuple %s9, %s10, %s11
  %s13 = sld [smem:[#allocation0]]
  $region82: #{tpu_custom_call.1} parent=0
    _
  %s15 = ssub.s32 1, %s13
  %s16 = scalar_select 0, %s15, %s13
  $region1: #{tpu_custom_call.1} parent=0
    #allocation2 [shape = 'u8[4096]{0}', space=vmem, size = 0x1000, scoped, tag = 'input window, operand 0, single buffered']
    #allocation3 [shape = 's32[1]{0}', space=sflag, size = 0x4, scoped, tag = 'scoped memory for tpu_custom_call.1']
    #allocation4 [shape = 's32[1]{0}', space=sflag, size = 0x4, scoped, tag = 'scoped memory for tpu_custom_call.1']
    #allocation5 [shape = 'u8[65536]{0}', space=vmem, size = 0x10000, scoped, tag = 'input window, operand 1, single buffered']
    #allocation6 [shape = 's32[1]{0}', space=sflag, size = 0x4, scoped, tag = 'scoped memory for tpu_custom_call.1']
    #allocation7 [shape = 'u8[65536]{0}', space=vmem, size = 0x10000, scoped, tag = 'input window, operand 2, single buffered']
    #allocation8 [shape = 'u8[4096]{0}', space=vmem, size = 0x1000, scoped, tag = 'input window, operand 4, single buffered']
    #allocation9 [shape = 's32[1]{0}', space=sflag, size = 0x4, scoped, tag = 'scoped memory for tpu_custom_call.1']
    #allocation10 [shape = 'u8[16384]{0}', space=vmem, size = 0x4000, scoped, tag = 'input window, operand 5, single buffered']
    #allocation11 [shape = 'u8[4096]{0}', space=vmem, size = 0x1000, scoped, tag = 'output window, operand 0, single buffered']
    #allocation12 [shape = 'u8[4096]{0}', space=vmem, size = 0x1000, scoped, tag = 'output window, operand 1, single buffered']
    #allocation13 [shape = 's32[1]{0}', space=sflag, size = 0x4, scoped, tag = 'scoped memory for tpu_custom_call.1']
    #allocation14 [shape = 'u8[4096]{0}', space=vmem, size = 0x1000, scoped, tag = 'output window, operand 2, single buffered']
    %17 = vsyncpa [#allocation3], 0
    %18 = vsyncpa [#allocation6], 0
    %19 = vsyncpa [#allocation9], 0
    %20 = vsyncpa [#allocation4], 0
    %21 = vsyncpa [#allocation13], 0
    // Predicated region
    $region2: #{tpu_custom_call.1} parent=1 // pred_check
      _
    $region3: #{tpu_custom_call.1} parent=1 // pred_check_branch
      %23 = sbr.rel (0) target = $region5
    $region4: #{tpu_custom_call.1} parent=1 // pred_region
      %s25 = ssub.s32 128, 128
      %26 = vsyncadd [#allocation3], %s25
      %s28 = sshll.u32 [#allocation2], 4
      %s29 = int_to_ptr.vmem [resolvable:$true] %s28
      %31 = dma.hbm_to_vmem [thread:$0]  %s0, 128, %s29, [#allocation3]
    $region5: #{tpu_custom_call.1} parent=1 // pred_fallthru
      _
    // Predicated region
    $region6: #{tpu_custom_call.1} parent=1 // pred_check
      _
    $region7: #{tpu_custom_call.1} parent=1 // pred_check_branch
      %33 = sbr.rel (0) target = $region9
    $region8: #{tpu_custom_call.1} parent=1 // pred_region
      %s35 = ssub.s32 2048, 2048
      %36 = vsyncadd [#allocation6], %s35
      %s37 = sshll.u32 [#allocation5], 4
      %s38 = int_to_ptr.vmem [resolvable:$true] %s37
      %43 = dma.hbm_to_vmem [thread:$0]  %s1, 2048, %s38, [#allocation6], 128, 128, 8
    $region9: #{tpu_custom_call.1} parent=1 // pred_fallthru
      _
    // Predicated region
    $region10: #{tpu_custom_call.1} parent=1 // pred_check
      _
    $region11: #{tpu_custom_call.1} parent=1 // pred_check_branch
      %45 = sbr.rel (0) target = $region13
    $region12: #{tpu_custom_call.1} parent=1 // pred_region
      %s47 = ssub.s32 2048, 2048
      %48 = vsyncadd [#allocation6], %s47
      %s49 = sshll.u32 [#allocation7], 4
      %s50 = int_to_ptr.vmem [resolvable:$true] %s49
      %55 = dma.hbm_to_vmem [thread:$0]  %s2, 2048, %s50, [#allocation6], 128, 128, 8
    $region13: #{tpu_custom_call.1} parent=1 // pred_fallthru
      _
    // Predicated region
    $region14: #{tpu_custom_call.1} parent=1 // pred_check
      _
    $region15: #{tpu_custom_call.1} parent=1 // pred_check_branch
      %57 = sbr.rel (0) target = $region17
    $region16: #{tpu_custom_call.1} parent=1 // pred_region
      _
    $region17: #{tpu_custom_call.1} parent=1 // pred_fallthru
      _
    // Predicated region
    $region18: #{tpu_custom_call.1} parent=1 // pred_check
      _
    $region19: #{tpu_custom_call.1} parent=1 // pred_check_branch
      %59 = sbr.rel (0) target = $region21
    $region20: #{tpu_custom_call.1} parent=1 // pred_region
      %s61 = ssub.s32 128, 128
      %62 = vsyncadd [#allocation9], %s61
      %s64 = sshll.u32 [#allocation8], 4
      %s65 = int_to_ptr.vmem [resolvable:$true] %s64
      %67 = dma.hbm_to_vmem [thread:$0]  %s4, 128, %s65, [#allocation9]
    $region21: #{tpu_custom_call.1} parent=1 // pred_fallthru
      _
    // Predicated region
    $region22: #{tpu_custom_call.1} parent=1 // pred_check
      _
    $region23: #{tpu_custom_call.1} parent=1 // pred_check_branch
      %69 = sbr.rel (0) target = $region25
    $region24: #{tpu_custom_call.1} parent=1 // pred_region
      %s71 = ssub.s32 512, 512
      %72 = vsyncadd [#allocation9], %s71
      %s73 = sshll.u32 [#allocation10], 4
      %s74 = int_to_ptr.vmem [resolvable:$true] %s73
      %79 = dma.hbm_to_vmem [thread:$0]  %s5, 512, %s74, [#allocation9], 128, 128, 8
    $region25: #{tpu_custom_call.1} parent=1 // pred_fallthru
      _
    // Predicated region
    $region26: #{tpu_custom_call.1} parent=1 // pred_check
      _
    $region27: #{tpu_custom_call.1} parent=1 // pred_check_branch
      %81 = sbr.rel (0) target = $region29
    $region28: #{tpu_custom_call.1} parent=1 // pred_region
      _
    $region29: #{tpu_custom_call.1} parent=1 // pred_fallthru
      _
    // Predicated region
    $region30: #{tpu_custom_call.1} parent=1 // pred_check
      _
    $region31: #{tpu_custom_call.1} parent=1 // pred_check_branch
      %83 = sbr.rel (0) target = $region33
    $region32: #{tpu_custom_call.1} parent=1 // pred_region
      _
    $region33: #{tpu_custom_call.1} parent=1 // pred_fallthru
      _
    // Predicated region
    $region34: #{tpu_custom_call.1} parent=1 // pred_check
      _
    $region35: #{tpu_custom_call.1} parent=1 // pred_check_branch
      %85 = sbr.rel (0) target = $region37
    $region36: #{tpu_custom_call.1} parent=1 // pred_region
      _
    $region37: #{tpu_custom_call.1} parent=1 // pred_fallthru
      _
    // Predicated region
    $region38: #{tpu_custom_call.1} parent=1 // pred_check
      _
    $region39: #{tpu_custom_call.1} parent=1 // pred_check_branch
      %87 = sbr.rel (0) target = $region41
    $region40: #{tpu_custom_call.1} parent=1 // pred_region
      %88 = dma.done [#allocation3], 128
    $region41: #{tpu_custom_call.1} parent=1 // pred_fallthru
      _
    // Predicated region
    $region42: #{tpu_custom_call.1} parent=1 // pred_check
      _
    $region43: #{tpu_custom_call.1} parent=1 // pred_check_branch
      %90 = sbr.rel (0) target = $region45
    $region44: #{tpu_custom_call.1} parent=1 // pred_region
      %91 = dma.done [#allocation6], 2048
    $region45: #{tpu_custom_call.1} parent=1 // pred_fallthru
      _
    // Predicated region
    $region46: #{tpu_custom_call.1} parent=1 // pred_check
      _
    $region47: #{tpu_custom_call.1} parent=1 // pred_check_branch
      %93 = sbr.rel (0) target = $region49
    $region48: #{tpu_custom_call.1} parent=1 // pred_region
      %94 = dma.done [#allocation6], 2048
    $region49: #{tpu_custom_call.1} parent=1 // pred_fallthru
      _
    // Predicated region
    $region50: #{tpu_custom_call.1} parent=1 // pred_check
      _
    $region51: #{tpu_custom_call.1} parent=1 // pred_check_branch
      %96 = sbr.rel (0) target = $region53
    $region52: #{tpu_custom_call.1} parent=1 // pred_region
      %97 = dma.done [#allocation9], 128
    $region53: #{tpu_custom_call.1} parent=1 // pred_fallthru
      _
    // Predicated region
    $region54: #{tpu_custom_call.1} parent=1 // pred_check
      _
    $region55: #{tpu_custom_call.1} parent=1 // pred_check_branch
      %99 = sbr.rel (0) target = $region57
    $region56: #{tpu_custom_call.1} parent=1 // pred_region
      %100 = dma.done [#allocation9], 512
    $region57: #{tpu_custom_call.1} parent=1 // pred_fallthru
      _
    %v101 = vld [vmem:[#allocation2] sm:$0xff]
    %v102 = vld [vmem:[#allocation10] sm:$0xff]
    %v103 = vld [vmem:[#allocation10 + $0x8] sm:$0xff]
    %v104 = vld [vmem:[#allocation10 + $0x10] sm:$0xff]
    %v105 = vld [vmem:[#allocation10 + $0x18] sm:$0xff]
    %v106 = vld [vmem:[%s6] sm:$0x1]
    %v108 = vlaneseq
    %v109 = vshrl.u32 %v108, 7
    %v110 = vsub.s32 0, %v109
    %v111 = vrot.slane %v106, %v110
    %vm113 = vcmask 261120
    %v115 = vsel %vm113, %v101, 0
    %117 = vmatprep.subr.mxu0 0.0
    %118 = vmatpush1.msra.mxu0 %v102
    %119 = vmatprep.subr.mxu0 0.0
    %120 = vmatpush1.msra.mxu0 %v103
    %121 = vmatprep.subr.mxu0 0.0
    %122 = vmatpush1.msra.mxu0 %v104
    %123 = vmatprep.subr.mxu0 0.0
    %124 = vmatpush1.msra.mxu0 %v105
    %125 = vmatprep.subr.mxu0 0.0
    %126 = vmatpush1.msra.mxu0 0.0
    %127 = vmatprep.subr.mxu0 0.0
    %128 = vmatpush1.msra.mxu0 0.0
    %129 = vmatprep.subr.mxu0 0.0
    %130 = vmatpush1.msra.mxu0 0.0
    %131 = vmatprep.subr.mxu0 0.0
    %132 = vmatpush1.msra.mxu0 0.0
    %133 = vmatprep.subr.mxu0 0.0
    %134 = vmatpush1.msra.mxu0 0.0
    %135 = vmatprep.subr.mxu0 0.0
    %136 = vmatpush1.msra.mxu0 0.0
    %137 = vmatprep.subr.mxu0 0.0
    %138 = vmatpush1.msra.mxu0 0.0
    %139 = vmatprep.subr.mxu0 0.0
    %140 = vmatpush1.msra.mxu0 0.0
    %141 = vmatprep.subr.mxu0 0.0
    %142 = vmatpush1.msra.mxu0 0.0
    %143 = vmatprep.subr.mxu0 0.0
    %144 = vmatpush1.msra.mxu0 0.0
    %145 = vmatprep.subr.mxu0 0.0
    %146 = vmatpush1.msra.mxu0 0.0
    %147 = vmatprep.subr.mxu0 0.0
    %148 = vmatpush1.msra.mxu0 0.0
    %149 = vmatprep.subr.mxu0 0.0
    %150 = vmatpush1.msra.mxu0 0.0
    %151 = vmatprep.subr.mxu0 0.0
    %152 = vmatpush1.msra.mxu0 0.0
    %153 = vmatprep.subr.mxu0 0.0
    %154 = vmatpush1.msra.mxu0 0.0
    %155 = vmatprep.subr.mxu0 0.0
    %156 = vmatpush1.msra.mxu0 0.0
    %157 = vmatprep.subr.mxu0 0.0
    %158 = vmatpush1.msra.mxu0 0.0
    %159 = vmatprep.subr.mxu0 0.0
    %160 = vmatpush1.msra.mxu0 0.0
    %161 = vmatprep.subr.mxu0 0.0
    %162 = vmatpush1.msra.mxu0 0.0
    %163 = vmatprep.subr.mxu0 0.0
    %164 = vmatpush1.msra.mxu0 0.0
    %165 = vmatprep.subr.mxu0 0.0
    %166 = vmatpush1.msra.mxu0 0.0
    %167 = vmatprep.subr.mxu0 0.0
    %168 = vmatpush1.msra.mxu0 0.0
    %169 = vmatprep.subr.mxu0 0.0
    %170 = vmatpush1.msra.mxu0 0.0
    %171 = vmatprep.subr.mxu0 0.0
    %172 = vmatpush1.msra.mxu0 0.0
    %173 = vmatprep.subr.mxu0 0.0
    %174 = vmatpush1.msra.mxu0 0.0
    %175 = vmatprep.subr.mxu0 0.0
    %176 = vmatpush1.msra.mxu0 0.0
    %177 = vmatprep.subr.mxu0 0.0
    %178 = vmatpush1.msra.mxu0 0.0
    %179 = vmatprep.subr.mxu0 0.0
    %180 = vmatpush1.msra.mxu0 0.0
    %181 = vmatprep.mubr.f32.mxu0 0.0
    %182 = vmatmul.mubr.f32.gmra.mrb[0].mxu0 %v115
    %v183 = vpop.f32.mrb[0].mxu0
    %v184 = vadd.f32 %v111, %v183
    %v185 = vpop.f32.mrb[0].mxu0
    %186 = vdwg.mxu0
    %v187 = vld [vmem:[#allocation8] sm:$0xff]
    %v188 = vlaneseq
    %v189 = vshrl.u32 %v188, 7
    %v190 = vsub.s32 0, %v189
    %v191 = vrot.slane %v187, %v190
    %193 = vbcast.lane.b32.xlu0 %v191, 256
    %v194 = vpop.permute.xlu0 %193
    %s196 = sor.u32 256, 8
    %197 = vbcast.lane.b32.xlu0 %v191, %s196
    %v198 = vpop.permute.xlu0 %197
    %v199 = vlaneseq
    %v200 = vshrl.u32 %v199, 7
    %v201 = vsub.s32 1, %v200
    %v202 = vrot.slane %v187, %v201
    %204 = vbcast.lane.b32.xlu0 %v202, 256
    %v205 = vpop.permute.xlu0 %204
    %s207 = sor.u32 256, 8
    %208 = vbcast.lane.b32.xlu0 %v202, %s207
    %v209 = vpop.permute.xlu0 %208
    %v210 = vlaneseq
    %v211 = vshrl.u32 %v210, 7
    %v212 = vsub.s32 2, %v211
    %v213 = vrot.slane %v187, %v212
    %215 = vbcast.lane.b32.xlu0 %v213, 256
    %v216 = vpop.permute.xlu0 %215
    %s218 = sor.u32 256, 8
    %219 = vbcast.lane.b32.xlu0 %v213, %s218
    %v220 = vpop.permute.xlu0 %219
    %v221 = vlaneseq
    %v222 = vshrl.u32 %v221, 7
    %v223 = vsub.s32 3, %v222
    %v224 = vrot.slane %v187, %v223
    %226 = vbcast.lane.b32.xlu0 %v224, 256
    %v227 = vpop.permute.xlu0 %226
    %s229 = sor.u32 256, 8
    %230 = vbcast.lane.b32.xlu0 %v224, %s229
    %v231 = vpop.permute.xlu0 %230
    %v232 = vlaneseq
    %v233 = vshrl.u32 %v232, 7
    %v234 = vsub.s32 4, %v233
    %v235 = vrot.slane %v187, %v234
    %237 = vbcast.lane.b32.xlu0 %v235, 256
    %v238 = vpop.permute.xlu0 %237
    %s240 = sor.u32 256, 8
    %241 = vbcast.lane.b32.xlu0 %v235, %s240
    %v242 = vpop.permute.xlu0 %241
    %v243 = vlaneseq
    %v244 = vshrl.u32 %v243, 7
    %v245 = vsub.s32 5, %v244
    %v246 = vrot.slane %v187, %v245
    %248 = vbcast.lane.b32.xlu0 %v246, 256
    %v249 = vpop.permute.xlu0 %248
    %s251 = sor.u32 256, 8
    %252 = vbcast.lane.b32.xlu0 %v246, %s251
    %v253 = vpop.permute.xlu0 %252
    %v254 = vlaneseq
    %v255 = vshrl.u32 %v254, 7
    %v256 = vsub.s32 6, %v255
    %v257 = vrot.slane %v187, %v256
    %259 = vbcast.lane.b32.xlu0 %v257, 256
    %v260 = vpop.permute.xlu0 %259
    %s262 = sor.u32 256, 8
    %263 = vbcast.lane.b32.xlu0 %v257, %s262
    %v264 = vpop.permute.xlu0 %263
    %v265 = vlaneseq
    %v266 = vshrl.u32 %v265, 7
    %v267 = vsub.s32 7, %v266
    %v268 = vrot.slane %v187, %v267
    %270 = vbcast.lane.b32.xlu0 %v268, 256
    %v271 = vpop.permute.xlu0 %270
    %s273 = sor.u32 256, 8
    %274 = vbcast.lane.b32.xlu0 %v268, %s273
    %v275 = vpop.permute.xlu0 %274
    %v276 = vld [vmem:[%s8] sm:$0x1]
    %v278 = vlaneseq
    %v279 = vshrl.u32 %v278, 7
    %v280 = vsub.s32 0, %v279
    %v281 = vrot.slane %v276, %v280
    %v283 = vmul.f32 %v194, %v281
    %v284 = vmul.f32 %v198, %v281
    %v285 = vmul.f32 %v205, %v281
    %v286 = vmul.f32 %v209, %v281
    %v287 = vmul.f32 %v216, %v281
    %v288 = vmul.f32 %v220, %v281
    %v289 = vmul.f32 %v227, %v281
    %v290 = vmul.f32 %v231, %v281
    %v291 = vmul.f32 %v238, %v281
    %v292 = vmul.f32 %v242, %v281
    %v293 = vmul.f32 %v249, %v281
    %v294 = vmul.f32 %v253, %v281
    %v295 = vmul.f32 %v260, %v281
    %v296 = vmul.f32 %v264, %v281
    %v297 = vmul.f32 %v271, %v281
    %v298 = vmul.f32 %v275, %v281
    %v299 = vld [vmem:[#allocation7] sm:$0xff]
    %v300 = vld [vmem:[#allocation7 + $0x8] sm:$0xff]
    %v301 = vld [vmem:[#allocation7 + $0x10] sm:$0xff]
    %v302 = vld [vmem:[#allocation7 + $0x18] sm:$0xff]
    %v303 = vld [vmem:[#allocation7 + $0x20] sm:$0xff]
    %v304 = vld [vmem:[#allocation7 + $0x28] sm:$0xff]
    %v305 = vld [vmem:[#allocation7 + $0x30] sm:$0xff]
    %v306 = vld [vmem:[#allocation7 + $0x38] sm:$0xff]
    %v307 = vld [vmem:[#allocation7 + $0x40] sm:$0xff]
    %v308 = vld [vmem:[#allocation7 + $0x48] sm:$0xff]
    %v309 = vld [vmem:[#allocation7 + $0x50] sm:$0xff]
    %v310 = vld [vmem:[#allocation7 + $0x58] sm:$0xff]
    %v311 = vld [vmem:[#allocation7 + $0x60] sm:$0xff]
    %v312 = vld [vmem:[#allocation7 + $0x68] sm:$0xff]
    %v313 = vld [vmem:[#allocation7 + $0x70] sm:$0xff]
    %v314 = vld [vmem:[#allocation7 + $0x78] sm:$0xff]
    %v316 = vcombine.high %v184, %v184
    %v318 = vunpack.c.l.s4 1966171168
    %v319 = vunpack.c.0.s8 %v318
    %v320 = vlaneseq
    %v321 = vshrl.u32 %v320, 7
    %v322 = vsub.s32 %v319, %v321
    %v323 = vrot.slane %v184, %v322
    %v325 = vunpack.c.l.s4 1966171168
    %v326 = vunpack.c.0.s8 %v325
    %v327 = vlaneseq
    %v328 = vshrl.u32 %v327, 7
    %v329 = vsub.s32 %v326, %v328
    %v330 = vrot.slane %v316, %v329
    %v331 = vcombine.high %v323, %v323
    %v332 = vcombine.high %v330, %v330
    %v334 = vunpack.c.l.s4 1966171168
    %v335 = vunpack.c.0.s8 %v334
    %v336 = vlaneseq
    %v337 = vshrl.u32 %v336, 7
    %v338 = vsub.s32 %v335, %v337
    %v339 = vrot.slane %v323, %v338
    %v341 = vunpack.c.l.s4 1966171168
    %v342 = vunpack.c.0.s8 %v341
    %v343 = vlaneseq
    %v344 = vshrl.u32 %v343, 7
    %v345 = vsub.s32 %v342, %v344
    %v346 = vrot.slane %v330, %v345
    %v348 = vunpack.c.l.s4 1966171168
    %v349 = vunpack.c.0.s8 %v348
    %v350 = vlaneseq
    %v351 = vshrl.u32 %v350, 7
    %v352 = vsub.s32 %v349, %v351
    %v353 = vrot.slane %v331, %v352
    %v355 = vunpack.c.l.s4 1966171168
    %v356 = vunpack.c.0.s8 %v355
    %v357 = vlaneseq
    %v358 = vshrl.u32 %v357, 7
    %v359 = vsub.s32 %v356, %v358
    %v360 = vrot.slane %v332, %v359
    %v361 = vcombine.high %v339, %v339
    %v362 = vcombine.high %v346, %v346
    %v363 = vcombine.high %v353, %v353
    %v364 = vcombine.high %v360, %v360
    %v365 = vlaneseq
    %v366 = vshrl.u32 %v365, 7
    %v367 = vsub.s32 0, %v366
    %v368 = vrot.slane %v339, %v367
    %v369 = vlaneseq
    %v370 = vshrl.u32 %v369, 7
    %v371 = vsub.s32 0, %v370
    %v372 = vrot.slane %v353, %v371
    %v373 = vlaneseq
    %v374 = vshrl.u32 %v373, 7
    %v375 = vsub.s32 0, %v374
    %v376 = vrot.slane %v361, %v375
    %v377 = vlaneseq
    %v378 = vshrl.u32 %v377, 7
    %v379 = vsub.s32 0, %v378
    %v380 = vrot.slane %v363, %v379
    %v381 = vlaneseq
    %v382 = vshrl.u32 %v381, 7
    %v383 = vsub.s32 0, %v382
    %v384 = vrot.slane %v346, %v383
    %v385 = vlaneseq
    %v386 = vshrl.u32 %v385, 7
    %v387 = vsub.s32 0, %v386
    %v388 = vrot.slane %v360, %v387
    %v389 = vlaneseq
    %v390 = vshrl.u32 %v389, 7
    %v391 = vsub.s32 0, %v390
    %v392 = vrot.slane %v362, %v391
    %v393 = vlaneseq
    %v394 = vshrl.u32 %v393, 7
    %v395 = vsub.s32 0, %v394
    %v396 = vrot.slane %v364, %v395
    %v405 = vadd.f32 %v299, %v368
    %v406 = vadd.f32 %v300, %v368
    %v407 = vadd.f32 %v301, %v372
    %v408 = vadd.f32 %v302, %v372
    %v409 = vadd.f32 %v303, %v376
    %v410 = vadd.f32 %v304, %v376
    %v411 = vadd.f32 %v305, %v380
    %v412 = vadd.f32 %v306, %v380
    %v413 = vadd.f32 %v307, %v384
    %v414 = vadd.f32 %v308, %v384
    %v415 = vadd.f32 %v309, %v388
    %v416 = vadd.f32 %v310, %v388
    %v417 = vadd.f32 %v311, %v392
    %v418 = vadd.f32 %v312, %v392
    %v419 = vadd.f32 %v313, %v396
    %v420 = vadd.f32 %v314, %v396
    %v421 = vadd.f32 %v405, %v283
    %v422 = vadd.f32 %v406, %v284
    %v423 = vadd.f32 %v407, %v285
    %v424 = vadd.f32 %v408, %v286
    %v425 = vadd.f32 %v409, %v287
    %v426 = vadd.f32 %v410, %v288
    %v427 = vadd.f32 %v411, %v289
    %v428 = vadd.f32 %v412, %v290
    %v429 = vadd.f32 %v413, %v291
    %v430 = vadd.f32 %v414, %v292
    %v431 = vadd.f32 %v415, %v293
    %v432 = vadd.f32 %v416, %v294
    %v433 = vadd.f32 %v417, %v295
    %v434 = vadd.f32 %v418, %v296
    %v435 = vadd.f32 %v419, %v297
    %v436 = vadd.f32 %v420, %v298
    %v437 = vtanh.pop %v421
    %v438 = vtanh.pop %v422
    %v439 = vtanh.pop %v423
    %v440 = vtanh.pop %v424
    %v441 = vtanh.pop %v425
    %v442 = vtanh.pop %v426
    %v443 = vtanh.pop %v427
    %v444 = vtanh.pop %v428
    %v445 = vtanh.pop %v429
    %v446 = vtanh.pop %v430
    %v447 = vtanh.pop %v431
    %v448 = vtanh.pop %v432
    %v449 = vtanh.pop %v433
    %v450 = vtanh.pop %v434
    %v451 = vtanh.pop %v435
    %v452 = vtanh.pop %v436
    %v453 = vld [vmem:[%s7] sm:$0x1]
    %v455 = vlaneseq
    %v456 = vshrl.u32 %v455, 7
    %v457 = vsub.s32 0, %v456
    %v458 = vrot.slane %v453, %v457
    %v460 = vmul.f32 %v437, %v458
    %v461 = vmul.f32 %v438, %v458
    %v462 = vmul.f32 %v439, %v458
    %v463 = vmul.f32 %v440, %v458
    %v464 = vmul.f32 %v441, %v458
    %v465 = vmul.f32 %v442, %v458
    %v466 = vmul.f32 %v443, %v458
    %v467 = vmul.f32 %v444, %v458
    %v468 = vmul.f32 %v445, %v458
    %v469 = vmul.f32 %v446, %v458
    %v470 = vmul.f32 %v447, %v458
    %v471 = vmul.f32 %v448, %v458
    %v472 = vmul.f32 %v449, %v458
    %v473 = vmul.f32 %v450, %v458
    %v474 = vmul.f32 %v451, %v458
    %v475 = vmul.f32 %v452, %v458
    %v476 = vsel %vm113, %v460, 0.0
    %477 = vadd.xlane.f32.xlu0 %v476
    %v478 = vpop.xlane.xlu0 %477
    %v479 = vsel %vm113, %v461, 0.0
    %480 = vadd.xlane.f32.xlu0 %v479
    %v481 = vpop.xlane.xlu0 %480
    %v482 = vsel %vm113, %v462, 0.0
    %483 = vadd.xlane.f32.xlu0 %v482
    %v484 = vpop.xlane.xlu0 %483
    %v485 = vsel %vm113, %v463, 0.0
    %486 = vadd.xlane.f32.xlu0 %v485
    %v487 = vpop.xlane.xlu0 %486
    %v488 = vsel %vm113, %v464, 0.0
    %489 = vadd.xlane.f32.xlu0 %v488
    %v490 = vpop.xlane.xlu0 %489
    %v491 = vsel %vm113, %v465, 0.0
    %492 = vadd.xlane.f32.xlu0 %v491
    %v493 = vpop.xlane.xlu0 %492
    %v494 = vsel %vm113, %v466, 0.0
    %495 = vadd.xlane.f32.xlu0 %v494
    %v496 = vpop.xlane.xlu0 %495
    %v497 = vsel %vm113, %v467, 0.0
    %498 = vadd.xlane.f32.xlu0 %v497
    %v499 = vpop.xlane.xlu0 %498
    %v500 = vsel %vm113, %v468, 0.0
    %501 = vadd.xlane.f32.xlu0 %v500
    %v502 = vpop.xlane.xlu0 %501
    %v503 = vsel %vm113, %v469, 0.0
    %504 = vadd.xlane.f32.xlu0 %v503
    %v505 = vpop.xlane.xlu0 %504
    %v506 = vsel %vm113, %v470, 0.0
    %507 = vadd.xlane.f32.xlu0 %v506
    %v508 = vpop.xlane.xlu0 %507
    %v509 = vsel %vm113, %v471, 0.0
    %510 = vadd.xlane.f32.xlu0 %v509
    %v511 = vpop.xlane.xlu0 %510
    %v512 = vsel %vm113, %v472, 0.0
    %513 = vadd.xlane.f32.xlu0 %v512
    %v514 = vpop.xlane.xlu0 %513
    %v515 = vsel %vm113, %v473, 0.0
    %516 = vadd.xlane.f32.xlu0 %v515
    %v517 = vpop.xlane.xlu0 %516
    %v518 = vsel %vm113, %v474, 0.0
    %519 = vadd.xlane.f32.xlu0 %v518
    %v520 = vpop.xlane.xlu0 %519
    %v521 = vsel %vm113, %v475, 0.0
    %522 = vadd.xlane.f32.xlu0 %v521
    %v523 = vpop.xlane.xlu0 %522
    %v540 = vlaneseq
    %v541 = vand.u32 %v540, 127
    %v542 = vlaneseq
    %v543 = vshrl.u32 %v542, 7
    %v544 = vsub.s32 %v541, %v543
    %v545 = vrot.slane %v478, %v544
    %v546 = vadd.s32 %v541, 4294967288
    %v547 = vlaneseq
    %v548 = vshrl.u32 %v547, 7
    %v549 = vsub.s32 %v546, %v548
    %v550 = vrot.slane %v481, %v549
    %vm551 = vcmask 130112
    %v552 = vsel %vm551, %v550, %v545
    %v553 = vlaneseq
    %v554 = vshrl.u32 %v553, 7
    %v555 = vsub.s32 %v541, %v554
    %v556 = vrot.slane %v484, %v555
    %v557 = vlaneseq
    %v558 = vshrl.u32 %v557, 7
    %v559 = vsub.s32 %v546, %v558
    %v560 = vrot.slane %v487, %v559
    %v561 = vsel %vm551, %v560, %v556
    %v562 = vlaneseq
    %v563 = vshrl.u32 %v562, 7
    %v564 = vsub.s32 %v541, %v563
    %v565 = vrot.slane %v490, %v564
    %v566 = vlaneseq
    %v567 = vshrl.u32 %v566, 7
    %v568 = vsub.s32 %v546, %v567
    %v569 = vrot.slane %v493, %v568
    %v570 = vsel %vm551, %v569, %v565
    %v571 = vlaneseq
    %v572 = vshrl.u32 %v571, 7
    %v573 = vsub.s32 %v541, %v572
    %v574 = vrot.slane %v496, %v573
    %v575 = vlaneseq
    %v576 = vshrl.u32 %v575, 7
    %v577 = vsub.s32 %v546, %v576
    %v578 = vrot.slane %v499, %v577
    %v579 = vsel %vm551, %v578, %v574
    %v580 = vlaneseq
    %v581 = vshrl.u32 %v580, 7
    %v582 = vsub.s32 %v541, %v581
    %v583 = vrot.slane %v502, %v582
    %v584 = vlaneseq
    %v585 = vshrl.u32 %v584, 7
    %v586 = vsub.s32 %v546, %v585
    %v587 = vrot.slane %v505, %v586
    %v588 = vsel %vm551, %v587, %v583
    %v589 = vlaneseq
    %v590 = vshrl.u32 %v589, 7
    %v591 = vsub.s32 %v541, %v590
    %v592 = vrot.slane %v508, %v591
    %v593 = vlaneseq
    %v594 = vshrl.u32 %v593, 7
    %v595 = vsub.s32 %v546, %v594
    %v596 = vrot.slane %v511, %v595
    %v597 = vsel %vm551, %v596, %v592
    %v598 = vlaneseq
    %v599 = vshrl.u32 %v598, 7
    %v600 = vsub.s32 %v541, %v599
    %v601 = vrot.slane %v514, %v600
    %v602 = vlaneseq
    %v603 = vshrl.u32 %v602, 7
    %v604 = vsub.s32 %v546, %v603
    %v605 = vrot.slane %v517, %v604
    %v606 = vsel %vm551, %v605, %v601
    %v607 = vlaneseq
    %v608 = vshrl.u32 %v607, 7
    %v609 = vsub.s32 %v541, %v608
    %v610 = vrot.slane %v520, %v609
    %v611 = vlaneseq
    %v612 = vshrl.u32 %v611, 7
    %v613 = vsub.s32 %v546, %v612
    %v614 = vrot.slane %v523, %v613
    %v615 = vsel %vm551, %v614, %v610
    %vm616 = vcmask 1041409
    %v617 = vsel %vm616, %v561, %v552
    %vm618 = vcmask 1042434
    %v619 = vsel %vm618, %v570, %v617
    %vm620 = vcmask 1043459
    %v621 = vsel %vm620, %v579, %v619
    %vm622 = vcmask 1044484
    %v623 = vsel %vm622, %v588, %v621
    %vm624 = vcmask 1045509
    %v625 = vsel %vm624, %v597, %v623
    %vm626 = vcmask 1046534
    %v627 = vsel %vm626, %v606, %v625
    %vm628 = vcmask 1047559
    %v629 = vsel %vm628, %v615, %v627
    %vm631 = vcmask 130048
    %v632 = vsel %vm631, %v629, -inf
    %633 = vmax.xlane.f32.xlu0 %v632
    %v634 = vpop.xlane.xlu0 %633
    %v636 = vlaneseq
    %v637 = vshrl.u32 %v636, 7
    %v638 = vsub.s32 0, %v637
    %v639 = vrot.slane %v634, %v638
    %v640 = vlaneseq
    %v641 = vshrl.u32 %v640, 7
    %v642 = vsub.s32 1, %v641
    %v643 = vrot.slane %v634, %v642
    %v644 = vlaneseq
    %v645 = vshrl.u32 %v644, 7
    %v646 = vsub.s32 2, %v645
    %v647 = vrot.slane %v634, %v646
    %v648 = vlaneseq
    %v649 = vshrl.u32 %v648, 7
    %v650 = vsub.s32 3, %v649
    %v651 = vrot.slane %v634, %v650
    %v652 = vlaneseq
    %v653 = vshrl.u32 %v652, 7
    %v654 = vsub.s32 4, %v653
    %v655 = vrot.slane %v634, %v654
    %v656 = vlaneseq
    %v657 = vshrl.u32 %v656, 7
    %v658 = vsub.s32 5, %v657
    %v659 = vrot.slane %v634, %v658
    %v660 = vlaneseq
    %v661 = vshrl.u32 %v660, 7
    %v662 = vsub.s32 6, %v661
    %v663 = vrot.slane %v634, %v662
    %v664 = vlaneseq
    %v665 = vshrl.u32 %v664, 7
    %v666 = vsub.s32 7, %v665
    %v667 = vrot.slane %v634, %v666
    %v676 = vsub.f32 %v478, %v639
    %v677 = vsub.f32 %v481, %v639
    %v678 = vsub.f32 %v484, %v643
    %v679 = vsub.f32 %v487, %v643
    %v680 = vsub.f32 %v490, %v647
    %v681 = vsub.f32 %v493, %v647
    %v682 = vsub.f32 %v496, %v651
    %v683 = vsub.f32 %v499, %v651
    %v684 = vsub.f32 %v502, %v655
    %v685 = vsub.f32 %v505, %v655
    %v686 = vsub.f32 %v508, %v659
    %v687 = vsub.f32 %v511, %v659
    %v688 = vsub.f32 %v514, %v663
    %v689 = vsub.f32 %v517, %v663
    %v690 = vsub.f32 %v520, %v667
    %v691 = vsub.f32 %v523, %v667
    %v692 = vmul.f32 %v676, 1.442695
    %v693 = vpow.pop %v692
    %v694 = vmul.f32 %v677, 1.442695
    %v695 = vpow.pop %v694
    %v696 = vmul.f32 %v678, 1.442695
    %v697 = vpow.pop %v696
    %v698 = vmul.f32 %v679, 1.442695
    %v699 = vpow.pop %v698
    %v700 = vmul.f32 %v680, 1.442695
    %v701 = vpow.pop %v700
    %v702 = vmul.f32 %v681, 1.442695
    %v703 = vpow.pop %v702
    %v704 = vmul.f32 %v682, 1.442695
    %v705 = vpow.pop %v704
    %v706 = vmul.f32 %v683, 1.442695
    %v707 = vpow.pop %v706
    %v708 = vmul.f32 %v684, 1.442695
    %v709 = vpow.pop %v708
    %v710 = vmul.f32 %v685, 1.442695
    %v711 = vpow.pop %v710
    %v712 = vmul.f32 %v686, 1.442695
    %v713 = vpow.pop %v712
    %v714 = vmul.f32 %v687, 1.442695
    %v715 = vpow.pop %v714
    %v716 = vmul.f32 %v688, 1.442695
    %v717 = vpow.pop %v716
    %v718 = vmul.f32 %v689, 1.442695
    %v719 = vpow.pop %v718
    %v720 = vmul.f32 %v690, 1.442695
    %v721 = vpow.pop %v720
    %v722 = vmul.f32 %v691, 1.442695
    %v723 = vpow.pop %v722
    %v724 = vld [vmem:[%s3] sm:$0xff]
    %v726 = vlaneseq
    %v727 = vshrl.u32 %v726, 7
    %v728 = vsub.s32 0, %v727
    %v729 = vrot.slane %v724, %v728
    %731 = vbcast.lane.b32.xlu0 %v729, 256
    %v732 = vpop.permute.xlu0 %731
    %s734 = sor.u32 256, 8
    %735 = vbcast.lane.b32.xlu0 %v729, %s734
    %v736 = vpop.permute.xlu0 %735
    %v737 = vlaneseq
    %v738 = vshrl.u32 %v737, 7
    %v739 = vsub.s32 1, %v738
    %v740 = vrot.slane %v724, %v739
    %742 = vbcast.lane.b32.xlu0 %v740, 256
    %v743 = vpop.permute.xlu0 %742
    %s745 = sor.u32 256, 8
    %746 = vbcast.lane.b32.xlu0 %v740, %s745
    %v747 = vpop.permute.xlu0 %746
    %v748 = vlaneseq
    %v749 = vshrl.u32 %v748, 7
    %v750 = vsub.s32 2, %v749
    %v751 = vrot.slane %v724, %v750
    %753 = vbcast.lane.b32.xlu0 %v751, 256
    %v754 = vpop.permute.xlu0 %753
    %s756 = sor.u32 256, 8
    %757 = vbcast.lane.b32.xlu0 %v751, %s756
    %v758 = vpop.permute.xlu0 %757
    %v759 = vlaneseq
    %v760 = vshrl.u32 %v759, 7
    %v761 = vsub.s32 3, %v760
    %v762 = vrot.slane %v724, %v761
    %764 = vbcast.lane.b32.xlu0 %v762, 256
    %v765 = vpop.permute.xlu0 %764
    %s767 = sor.u32 256, 8
    %768 = vbcast.lane.b32.xlu0 %v762, %s767
    %v769 = vpop.permute.xlu0 %768
    %v770 = vlaneseq
    %v771 = vshrl.u32 %v770, 7
    %v772 = vsub.s32 4, %v771
    %v773 = vrot.slane %v724, %v772
    %775 = vbcast.lane.b32.xlu0 %v773, 256
    %v776 = vpop.permute.xlu0 %775
    %s778 = sor.u32 256, 8
    %779 = vbcast.lane.b32.xlu0 %v773, %s778
    %v780 = vpop.permute.xlu0 %779
    %v781 = vlaneseq
    %v782 = vshrl.u32 %v781, 7
    %v783 = vsub.s32 5, %v782
    %v784 = vrot.slane %v724, %v783
    %786 = vbcast.lane.b32.xlu0 %v784, 256
    %v787 = vpop.permute.xlu0 %786
    %s789 = sor.u32 256, 8
    %790 = vbcast.lane.b32.xlu0 %v784, %s789
    %v791 = vpop.permute.xlu0 %790
    %v792 = vlaneseq
    %v793 = vshrl.u32 %v792, 7
    %v794 = vsub.s32 6, %v793
    %v795 = vrot.slane %v724, %v794
    %797 = vbcast.lane.b32.xlu0 %v795, 256
    %v798 = vpop.permute.xlu0 %797
    %s800 = sor.u32 256, 8
    %801 = vbcast.lane.b32.xlu0 %v795, %s800
    %v802 = vpop.permute.xlu0 %801
    %v803 = vlaneseq
    %v804 = vshrl.u32 %v803, 7
    %v805 = vsub.s32 7, %v804
    %v806 = vrot.slane %v724, %v805
    %808 = vbcast.lane.b32.xlu0 %v806, 256
    %v809 = vpop.permute.xlu0 %808
    %s811 = sor.u32 256, 8
    %812 = vbcast.lane.b32.xlu0 %v806, %s811
    %v813 = vpop.permute.xlu0 %812
    %v830 = vmul.f32 %v693, %v732
    %v831 = vmul.f32 %v695, %v736
    %v832 = vmul.f32 %v697, %v743
    %v833 = vmul.f32 %v699, %v747
    %v834 = vmul.f32 %v701, %v754
    %v835 = vmul.f32 %v703, %v758
    %v836 = vmul.f32 %v705, %v765
    %v837 = vmul.f32 %v707, %v769
    %v838 = vmul.f32 %v709, %v776
    %v839 = vmul.f32 %v711, %v780
    %v840 = vmul.f32 %v713, %v787
    %v841 = vmul.f32 %v715, %v791
    %v842 = vmul.f32 %v717, %v798
    %v843 = vmul.f32 %v719, %v802
    %v844 = vmul.f32 %v721, %v809
    %v845 = vmul.f32 %v723, %v813
    %862 = vset.pattern.permute.xlu0 0
    %863 = vperm.xlu0 %862, %v830
    %v864 = vpop.permute.xlu0 %863
    %865 = vset.pattern.permute.xlu0 0
    %866 = vperm.xlu0 %865, %v831
    %v867 = vpop.permute.xlu0 %866
    %868 = vset.pattern.permute.xlu0 0
    %869 = vperm.xlu0 %868, %v832
    %v870 = vpop.permute.xlu0 %869
    %871 = vset.pattern.permute.xlu0 0
    %872 = vperm.xlu0 %871, %v833
    %v873 = vpop.permute.xlu0 %872
    %874 = vset.pattern.permute.xlu0 0
    %875 = vperm.xlu0 %874, %v834
    %v876 = vpop.permute.xlu0 %875
    %877 = vset.pattern.permute.xlu0 0
    %878 = vperm.xlu0 %877, %v835
    %v879 = vpop.permute.xlu0 %878
    %880 = vset.pattern.permute.xlu0 0
    %881 = vperm.xlu0 %880, %v836
    %v882 = vpop.permute.xlu0 %881
    %883 = vset.pattern.permute.xlu0 0
    %884 = vperm.xlu0 %883, %v837
    %v885 = vpop.permute.xlu0 %884
    %886 = vset.pattern.permute.xlu0 0
    %887 = vperm.xlu0 %886, %v838
    %v888 = vpop.permute.xlu0 %887
    %889 = vset.pattern.permute.xlu0 0
    %890 = vperm.xlu0 %889, %v839
    %v891 = vpop.permute.xlu0 %890
    %892 = vset.pattern.permute.xlu0 0
    %893 = vperm.xlu0 %892, %v840
    %v894 = vpop.permute.xlu0 %893
    %895 = vset.pattern.permute.xlu0 0
    %896 = vperm.xlu0 %895, %v841
    %v897 = vpop.permute.xlu0 %896
    %898 = vset.pattern.permute.xlu0 0
    %899 = vperm.xlu0 %898, %v842
    %v900 = vpop.permute.xlu0 %899
    %901 = vset.pattern.permute.xlu0 0
    %902 = vperm.xlu0 %901, %v843
    %v903 = vpop.permute.xlu0 %902
    %904 = vset.pattern.permute.xlu0 0
    %905 = vperm.xlu0 %904, %v844
    %v906 = vpop.permute.xlu0 %905
    %907 = vset.pattern.permute.xlu0 0
    %908 = vperm.xlu0 %907, %v845
    %v909 = vpop.permute.xlu0 %908
    %v910 = vlaneseq
    %v911 = vshrl.u32 %v910, 7
    %v912 = vsub.s32 %v541, %v911
    %v913 = vrot.slane %v864, %v912
    %v914 = vlaneseq
    %v915 = vshrl.u32 %v914, 7
    %v916 = vsub.s32 %v546, %v915
    %v917 = vrot.slane %v867, %v916
    %v918 = vsel %vm551, %v917, %v913
    %v919 = vlaneseq
    %v920 = vshrl.u32 %v919, 7
    %v921 = vsub.s32 %v541, %v920
    %v922 = vrot.slane %v870, %v921
    %v923 = vlaneseq
    %v924 = vshrl.u32 %v923, 7
    %v925 = vsub.s32 %v546, %v924
    %v926 = vrot.slane %v873, %v925
    %v927 = vsel %vm551, %v926, %v922
    %v928 = vlaneseq
    %v929 = vshrl.u32 %v928, 7
    %v930 = vsub.s32 %v541, %v929
    %v931 = vrot.slane %v876, %v930
    %v932 = vlaneseq
    %v933 = vshrl.u32 %v932, 7
    %v934 = vsub.s32 %v546, %v933
    %v935 = vrot.slane %v879, %v934
    %v936 = vsel %vm551, %v935, %v931
    %v937 = vlaneseq
    %v938 = vshrl.u32 %v937, 7
    %v939 = vsub.s32 %v541, %v938
    %v940 = vrot.slane %v882, %v939
    %v941 = vlaneseq
    %v942 = vshrl.u32 %v941, 7
    %v943 = vsub.s32 %v546, %v942
    %v944 = vrot.slane %v885, %v943
    %v945 = vsel %vm551, %v944, %v940
    %v946 = vlaneseq
    %v947 = vshrl.u32 %v946, 7
    %v948 = vsub.s32 %v541, %v947
    %v949 = vrot.slane %v888, %v948
    %v950 = vlaneseq
    %v951 = vshrl.u32 %v950, 7
    %v952 = vsub.s32 %v546, %v951
    %v953 = vrot.slane %v891, %v952
    %v954 = vsel %vm551, %v953, %v949
    %v955 = vlaneseq
    %v956 = vshrl.u32 %v955, 7
    %v957 = vsub.s32 %v541, %v956
    %v958 = vrot.slane %v894, %v957
    %v959 = vlaneseq
    %v960 = vshrl.u32 %v959, 7
    %v961 = vsub.s32 %v546, %v960
    %v962 = vrot.slane %v897, %v961
    %v963 = vsel %vm551, %v962, %v958
    %v964 = vlaneseq
    %v965 = vshrl.u32 %v964, 7
    %v966 = vsub.s32 %v541, %v965
    %v967 = vrot.slane %v900, %v966
    %v968 = vlaneseq
    %v969 = vshrl.u32 %v968, 7
    %v970 = vsub.s32 %v546, %v969
    %v971 = vrot.slane %v903, %v970
    %v972 = vsel %vm551, %v971, %v967
    %v973 = vlaneseq
    %v974 = vshrl.u32 %v973, 7
    %v975 = vsub.s32 %v541, %v974
    %v976 = vrot.slane %v906, %v975
    %v977 = vlaneseq
    %v978 = vshrl.u32 %v977, 7
    %v979 = vsub.s32 %v546, %v978
    %v980 = vrot.slane %v909, %v979
    %v981 = vsel %vm551, %v980, %v976
    %v982 = vsel %vm616, %v927, %v918
    %v983 = vsel %vm618, %v936, %v982
    %v984 = vsel %vm620, %v945, %v983
    %v985 = vsel %vm622, %v954, %v984
    %v986 = vsel %vm624, %v963, %v985
    %v987 = vsel %vm626, %v972, %v986
    %v988 = vsel %vm628, %v981, %v987
    %v990 = vsel %vm631, %v988, 0.0
    %991 = vadd.xlane.f32.xlu0 %v990
    %v992 = vpop.xlane.xlu0 %991
    %v994 = vlaneseq
    %v995 = vshrl.u32 %v994, 7
    %v996 = vsub.s32 0, %v995
    %v997 = vrot.slane %v992, %v996
    %v998 = vlaneseq
    %v999 = vshrl.u32 %v998, 7
    %v1000 = vsub.s32 1, %v999
    %v1001 = vrot.slane %v992, %v1000
    %v1002 = vlaneseq
    %v1003 = vshrl.u32 %v1002, 7
    %v1004 = vsub.s32 2, %v1003
    %v1005 = vrot.slane %v992, %v1004
    %v1006 = vlaneseq
    %v1007 = vshrl.u32 %v1006, 7
    %v1008 = vsub.s32 3, %v1007
    %v1009 = vrot.slane %v992, %v1008
    %v1010 = vlaneseq
    %v1011 = vshrl.u32 %v1010, 7
    %v1012 = vsub.s32 4, %v1011
    %v1013 = vrot.slane %v992, %v1012
    %v1014 = vlaneseq
    %v1015 = vshrl.u32 %v1014, 7
    %v1016 = vsub.s32 5, %v1015
    %v1017 = vrot.slane %v992, %v1016
    %v1018 = vlaneseq
    %v1019 = vshrl.u32 %v1018, 7
    %v1020 = vsub.s32 6, %v1019
    %v1021 = vrot.slane %v992, %v1020
    %v1022 = vlaneseq
    %v1023 = vshrl.u32 %v1022, 7
    %v1024 = vsub.s32 7, %v1023
    %v1025 = vrot.slane %v992, %v1024
    %v1034 = vrcp.pop %v997
    %v1035 = vmul.f32 %v830, %v1034
    %v1036 = vmul.f32 %v831, %v1034
    %v1037 = vrcp.pop %v1001
    %v1038 = vmul.f32 %v832, %v1037
    %v1039 = vmul.f32 %v833, %v1037
    %v1040 = vrcp.pop %v1005
    %v1041 = vmul.f32 %v834, %v1040
    %v1042 = vmul.f32 %v835, %v1040
    %v1043 = vrcp.pop %v1009
    %v1044 = vmul.f32 %v836, %v1043
    %v1045 = vmul.f32 %v837, %v1043
    %v1046 = vrcp.pop %v1013
    %v1047 = vmul.f32 %v838, %v1046
    %v1048 = vmul.f32 %v839, %v1046
    %v1049 = vrcp.pop %v1017
    %v1050 = vmul.f32 %v840, %v1049
    %v1051 = vmul.f32 %v841, %v1049
    %v1052 = vrcp.pop %v1021
    %v1053 = vmul.f32 %v842, %v1052
    %v1054 = vmul.f32 %v843, %v1052
    %v1055 = vrcp.pop %v1025
    %v1056 = vmul.f32 %v844, %v1055
    %v1057 = vmul.f32 %v845, %v1055
    %v1058 = vld [vmem:[#allocation5] sm:$0xff]
    %v1059 = vld [vmem:[#allocation5 + $0x8] sm:$0xff]
    %v1060 = vld [vmem:[#allocation5 + $0x10] sm:$0xff]
    %v1061 = vld [vmem:[#allocation5 + $0x18] sm:$0xff]
    %v1062 = vld [vmem:[#allocation5 + $0x20] sm:$0xff]
    %v1063 = vld [vmem:[#allocation5 + $0x28] sm:$0xff]
    %v1064 = vld [vmem:[#allocation5 + $0x30] sm:$0xff]
    %v1065 = vld [vmem:[#allocation5 + $0x38] sm:$0xff]
    %v1066 = vld [vmem:[#allocation5 + $0x40] sm:$0xff]
    %v1067 = vld [vmem:[#allocation5 + $0x48] sm:$0xff]
    %v1068 = vld [vmem:[#allocation5 + $0x50] sm:$0xff]
    %v1069 = vld [vmem:[#allocation5 + $0x58] sm:$0xff]
    %v1070 = vld [vmem:[#allocation5 + $0x60] sm:$0xff]
    %v1071 = vld [vmem:[#allocation5 + $0x68] sm:$0xff]
    %v1072 = vld [vmem:[#allocation5 + $0x70] sm:$0xff]
    %v1073 = vld [vmem:[#allocation5 + $0x78] sm:$0xff]
    %1075 = vset.pattern.permute.xlu0 0
    %1076 = vperm.xlu0 %1075, %v1035
    %v1077 = vpop.permute.xlu0 %1076
    %1080 = vset.pattern.permute.xlu0 0
    %1081 = vperm.xlu0 %1080, %v1036
    %v1082 = vpop.permute.xlu0 %1081
    %1085 = vset.pattern.permute.xlu0 0
    %1086 = vperm.xlu0 %1085, %v1038
    %v1087 = vpop.permute.xlu0 %1086
    %1090 = vset.pattern.permute.xlu0 0
    %1091 = vperm.xlu0 %1090, %v1039
    %v1092 = vpop.permute.xlu0 %1091
    %1095 = vset.pattern.permute.xlu0 0
    %1096 = vperm.xlu0 %1095, %v1041
    %v1097 = vpop.permute.xlu0 %1096
    %1100 = vset.pattern.permute.xlu0 0
    %1101 = vperm.xlu0 %1100, %v1042
    %v1102 = vpop.permute.xlu0 %1101
    %1105 = vset.pattern.permute.xlu0 0
    %1106 = vperm.xlu0 %1105, %v1044
    %v1107 = vpop.permute.xlu0 %1106
    %1110 = vset.pattern.permute.xlu0 0
    %1111 = vperm.xlu0 %1110, %v1045
    %v1112 = vpop.permute.xlu0 %1111
    %1115 = vset.pattern.permute.xlu0 0
    %1116 = vperm.xlu0 %1115, %v1047
    %v1117 = vpop.permute.xlu0 %1116
    %1120 = vset.pattern.permute.xlu0 0
    %1121 = vperm.xlu0 %1120, %v1048
    %v1122 = vpop.permute.xlu0 %1121
    %1125 = vset.pattern.permute.xlu0 0
    %1126 = vperm.xlu0 %1125, %v1050
    %v1127 = vpop.permute.xlu0 %1126
    %1130 = vset.pattern.permute.xlu0 0
    %1131 = vperm.xlu0 %1130, %v1051
    %v1132 = vpop.permute.xlu0 %1131
    %1135 = vset.pattern.permute.xlu0 0
    %1136 = vperm.xlu0 %1135, %v1053
    %v1137 = vpop.permute.xlu0 %1136
    %1140 = vset.pattern.permute.xlu0 0
    %1141 = vperm.xlu0 %1140, %v1054
    %v1142 = vpop.permute.xlu0 %1141
    %1145 = vset.pattern.permute.xlu0 0
    %1146 = vperm.xlu0 %1145, %v1056
    %v1147 = vpop.permute.xlu0 %1146
    %1150 = vset.pattern.permute.xlu0 0
    %1151 = vperm.xlu0 %1150, %v1057
    %v1152 = vpop.permute.xlu0 %1151
    %v1154 = vmul.f32 %v1077, %v1058
    %v1155 = vmul.f32 %v1082, %v1059
    %v1156 = vmul.f32 %v1087, %v1060
    %v1157 = vmul.f32 %v1092, %v1061
    %v1158 = vmul.f32 %v1097, %v1062
    %v1159 = vmul.f32 %v1102, %v1063
    %v1160 = vmul.f32 %v1107, %v1064
    %v1161 = vmul.f32 %v1112, %v1065
    %v1162 = vmul.f32 %v1117, %v1066
    %v1163 = vmul.f32 %v1122, %v1067
    %v1164 = vmul.f32 %v1127, %v1068
    %v1165 = vmul.f32 %v1132, %v1069
    %v1166 = vmul.f32 %v1137, %v1070
    %v1167 = vmul.f32 %v1142, %v1071
    %v1168 = vmul.f32 %v1147, %v1072
    %v1169 = vmul.f32 %v1152, %v1073
    %v1170 = vsel %vm113, %v1154, 0.0
    %v1171 = vsel %vm113, %v1155, 0.0
    %v1172 = vadd.f32 %v1170, %v1171
    %v1173 = vrot.slane %v1172, 4
    %v1174 = vadd.f32 %v1172, %v1173
    %v1175 = vrot.slane %v1174, 2
    %v1176 = vadd.f32 %v1174, %v1175
    %v1177 = vrot.slane %v1176, 1
    %v1178 = vadd.f32 %v1176, %v1177
    %v1179 = vsel %vm113, %v1156, 0.0
    %v1180 = vsel %vm113, %v1157, 0.0
    %v1181 = vadd.f32 %v1179, %v1180
    %v1182 = vrot.slane %v1181, 4
    %v1183 = vadd.f32 %v1181, %v1182
    %v1184 = vrot.slane %v1183, 2
    %v1185 = vadd.f32 %v1183, %v1184
    %v1186 = vrot.slane %v1185, 1
    %v1187 = vadd.f32 %v1185, %v1186
    %v1188 = vsel %vm113, %v1158, 0.0
    %v1189 = vsel %vm113, %v1159, 0.0
    %v1190 = vadd.f32 %v1188, %v1189
    %v1191 = vrot.slane %v1190, 4
    %v1192 = vadd.f32 %v1190, %v1191
    %v1193 = vrot.slane %v1192, 2
    %v1194 = vadd.f32 %v1192, %v1193
    %v1195 = vrot.slane %v1194, 1
    %v1196 = vadd.f32 %v1194, %v1195
    %v1197 = vsel %vm113, %v1160, 0.0
    %v1198 = vsel %vm113, %v1161, 0.0
    %v1199 = vadd.f32 %v1197, %v1198
    %v1200 = vrot.slane %v1199, 4
    %v1201 = vadd.f32 %v1199, %v1200
    %v1202 = vrot.slane %v1201, 2
    %v1203 = vadd.f32 %v1201, %v1202
    %v1204 = vrot.slane %v1203, 1
    %v1205 = vadd.f32 %v1203, %v1204
    %v1206 = vsel %vm113, %v1162, 0.0
    %v1207 = vsel %vm113, %v1163, 0.0
    %v1208 = vadd.f32 %v1206, %v1207
    %v1209 = vrot.slane %v1208, 4
    %v1210 = vadd.f32 %v1208, %v1209
    %v1211 = vrot.slane %v1210, 2
    %v1212 = vadd.f32 %v1210, %v1211
    %v1213 = vrot.slane %v1212, 1
    %v1214 = vadd.f32 %v1212, %v1213
    %v1215 = vsel %vm113, %v1164, 0.0
    %v1216 = vsel %vm113, %v1165, 0.0
    %v1217 = vadd.f32 %v1215, %v1216
    %v1218 = vrot.slane %v1217, 4
    %v1219 = vadd.f32 %v1217, %v1218
    %v1220 = vrot.slane %v1219, 2
    %v1221 = vadd.f32 %v1219, %v1220
    %v1222 = vrot.slane %v1221, 1
    %v1223 = vadd.f32 %v1221, %v1222
    %v1224 = vsel %vm113, %v1166, 0.0
    %v1225 = vsel %vm113, %v1167, 0.0
    %v1226 = vadd.f32 %v1224, %v1225
    %v1227 = vrot.slane %v1226, 4
    %v1228 = vadd.f32 %v1226, %v1227
    %v1229 = vrot.slane %v1228, 2
    %v1230 = vadd.f32 %v1228, %v1229
    %v1231 = vrot.slane %v1230, 1
    %v1232 = vadd.f32 %v1230, %v1231
    %v1233 = vsel %vm113, %v1168, 0.0
    %v1234 = vsel %vm113, %v1169, 0.0
    %v1235 = vadd.f32 %v1233, %v1234
    %v1236 = vrot.slane %v1235, 4
    %v1237 = vadd.f32 %v1235, %v1236
    %v1238 = vrot.slane %v1237, 2
    %v1239 = vadd.f32 %v1237, %v1238
    %v1240 = vrot.slane %v1239, 1
    %v1241 = vadd.f32 %v1239, %v1240
    %v1250 = vsel %vm616, %v1187, %v1178
    %v1251 = vsel %vm618, %v1196, %v1250
    %v1252 = vsel %vm620, %v1205, %v1251
    %v1253 = vsel %vm622, %v1214, %v1252
    %v1254 = vsel %vm624, %v1223, %v1253
    %v1255 = vsel %vm626, %v1232, %v1254
    %v1256 = vsel %vm628, %v1241, %v1255
    %1258 = vst.msk [vmem:[#allocation11] sm:$0xff] %vm113, %v1256
    %v1259 = vlaneseq
    %v1260 = vshrl.u32 %v1259, 7
    %v1261 = vsub.s32 %v541, %v1260
    %v1262 = vrot.slane %v1077, %v1261
    %v1263 = vlaneseq
    %v1264 = vshrl.u32 %v1263, 7
    %v1265 = vsub.s32 %v546, %v1264
    %v1266 = vrot.slane %v1082, %v1265
    %v1267 = vsel %vm551, %v1266, %v1262
    %v1268 = vlaneseq
    %v1269 = vshrl.u32 %v1268, 7
    %v1270 = vsub.s32 %v541, %v1269
    %v1271 = vrot.slane %v1087, %v1270
    %v1272 = vlaneseq
    %v1273 = vshrl.u32 %v1272, 7
    %v1274 = vsub.s32 %v546, %v1273
    %v1275 = vrot.slane %v1092, %v1274
    %v1276 = vsel %vm551, %v1275, %v1271
    %v1277 = vlaneseq
    %v1278 = vshrl.u32 %v1277, 7
    %v1279 = vsub.s32 %v541, %v1278
    %v1280 = vrot.slane %v1097, %v1279
    %v1281 = vlaneseq
    %v1282 = vshrl.u32 %v1281, 7
    %v1283 = vsub.s32 %v546, %v1282
    %v1284 = vrot.slane %v1102, %v1283
    %v1285 = vsel %vm551, %v1284, %v1280
    %v1286 = vlaneseq
    %v1287 = vshrl.u32 %v1286, 7
    %v1288 = vsub.s32 %v541, %v1287
    %v1289 = vrot.slane %v1107, %v1288
    %v1290 = vlaneseq
    %v1291 = vshrl.u32 %v1290, 7
    %v1292 = vsub.s32 %v546, %v1291
    %v1293 = vrot.slane %v1112, %v1292
    %v1294 = vsel %vm551, %v1293, %v1289
    %v1295 = vlaneseq
    %v1296 = vshrl.u32 %v1295, 7
    %v1297 = vsub.s32 %v541, %v1296
    %v1298 = vrot.slane %v1117, %v1297
    %v1299 = vlaneseq
    %v1300 = vshrl.u32 %v1299, 7
    %v1301 = vsub.s32 %v546, %v1300
    %v1302 = vrot.slane %v1122, %v1301
    %v1303 = vsel %vm551, %v1302, %v1298
    %v1304 = vlaneseq
    %v1305 = vshrl.u32 %v1304, 7
    %v1306 = vsub.s32 %v541, %v1305
    %v1307 = vrot.slane %v1127, %v1306
    %v1308 = vlaneseq
    %v1309 = vshrl.u32 %v1308, 7
    %v1310 = vsub.s32 %v546, %v1309
    %v1311 = vrot.slane %v1132, %v1310
    %v1312 = vsel %vm551, %v1311, %v1307
    %v1313 = vlaneseq
    %v1314 = vshrl.u32 %v1313, 7
    %v1315 = vsub.s32 %v541, %v1314
    %v1316 = vrot.slane %v1137, %v1315
    %v1317 = vlaneseq
    %v1318 = vshrl.u32 %v1317, 7
    %v1319 = vsub.s32 %v546, %v1318
    %v1320 = vrot.slane %v1142, %v1319
    %v1321 = vsel %vm551, %v1320, %v1316
    %v1322 = vlaneseq
    %v1323 = vshrl.u32 %v1322, 7
    %v1324 = vsub.s32 %v541, %v1323
    %v1325 = vrot.slane %v1147, %v1324
    %v1326 = vlaneseq
    %v1327 = vshrl.u32 %v1326, 7
    %v1328 = vsub.s32 %v546, %v1327
    %v1329 = vrot.slane %v1152, %v1328
    %v1330 = vsel %vm551, %v1329, %v1325
    %v1331 = vsel %vm616, %v1276, %v1267
    %v1332 = vsel %vm618, %v1285, %v1331
    %v1333 = vsel %vm620, %v1294, %v1332
    %v1334 = vsel %vm622, %v1303, %v1333
    %v1335 = vsel %vm624, %v1312, %v1334
    %v1336 = vsel %vm626, %v1321, %v1335
    %v1337 = vsel %vm628, %v1330, %v1336
    %1339 = vst.msk [vmem:[#allocation12] sm:$0xff] %vm631, %v1337
    %v1340 = vadd.f32 %v187, %v1337
    %1341 = vst.msk [vmem:[#allocation14] sm:$0xff] %vm631, %v1340
    // Predicated region
    $region58: #{tpu_custom_call.1} parent=1 // pred_check
      _
    $region59: #{tpu_custom_call.1} parent=1 // pred_check_branch
      %1343 = sbr.rel (0) target = $region61
    $region60: #{tpu_custom_call.1} parent=1 // pred_region
      %s1345 = ssub.s32 128, 128
      %1346 = vsyncadd [#allocation4], %s1345
      %s1348 = sshll.u32 [#allocation11], 4
      %s1349 = int_to_ptr.vmem [resolvable:$true] %s1348
      %1351 = dma.vmem_to_hbm [thread:$0]  %s1349, 128, %s9, [#allocation4]
    $region61: #{tpu_custom_call.1} parent=1 // pred_fallthru
      _
    // Predicated region
    $region62: #{tpu_custom_call.1} parent=1 // pred_check
      _
    $region63: #{tpu_custom_call.1} parent=1 // pred_check_branch
      %1353 = sbr.rel (0) target = $region65
    $region64: #{tpu_custom_call.1} parent=1 // pred_region
      %s1355 = ssub.s32 128, 128
      %1356 = vsyncadd [#allocation13], %s1355
      %s1358 = sshll.u32 [#allocation12], 4
      %s1359 = int_to_ptr.vmem [resolvable:$true] %s1358
      %1361 = dma.vmem_to_hbm [thread:$0]  %s1359, 128, %s10, [#allocation13]
    $region65: #{tpu_custom_call.1} parent=1 // pred_fallthru
      _
    // Predicated region
    $region66: #{tpu_custom_call.1} parent=1 // pred_check
      _
    $region67: #{tpu_custom_call.1} parent=1 // pred_check_branch
      %1363 = sbr.rel (0) target = $region69
    $region68: #{tpu_custom_call.1} parent=1 // pred_region
      %s1365 = ssub.s32 128, 128
      %1366 = vsyncadd [#allocation13], %s1365
      %s1368 = sshll.u32 [#allocation14], 4
      %s1369 = int_to_ptr.vmem [resolvable:$true] %s1368
      %1371 = dma.vmem_to_hbm [thread:$0]  %s1369, 128, %s11, [#allocation13]
    $region69: #{tpu_custom_call.1} parent=1 // pred_fallthru
      _
    // Predicated region
    $region70: #{tpu_custom_call.1} parent=1 // pred_check
      _
    $region71: #{tpu_custom_call.1} parent=1 // pred_check_branch
      %1373 = sbr.rel (0) target = $region73
    $region72: #{tpu_custom_call.1} parent=1 // pred_region
      %1374 = dma.done [#allocation4], 128
    $region73: #{tpu_custom_call.1} parent=1 // pred_fallthru
      _
    // Predicated region
    $region74: #{tpu_custom_call.1} parent=1 // pred_check
      _
    $region75: #{tpu_custom_call.1} parent=1 // pred_check_branch
      %1376 = sbr.rel (0) target = $region77
    $region76: #{tpu_custom_call.1} parent=1 // pred_region
      %1377 = dma.done [#allocation13], 128
    $region77: #{tpu_custom_call.1} parent=1 // pred_fallthru
      _
    // Predicated region
    $region78: #{tpu_custom_call.1} parent=1 // pred_check
      _
    $region79: #{tpu_custom_call.1} parent=1 // pred_check_branch
      %1379 = sbr.rel (0) target = $region81
    $region80: #{tpu_custom_call.1} parent=1 // pred_region
      %1380 = dma.done [#allocation13], 128
    $region81: #{tpu_custom_call.1} parent=1 // pred_fallthru
      _
    %1381 = vsyncpa [#allocation3], 1
    %1382 = vsyncpa [#allocation6], 1
    %1383 = vsyncpa [#allocation9], 1
    %1384 = vsyncpa [#allocation4], 1
    %1385 = vsyncpa [#allocation13], 1

</llo_original>
